<compile_context>
chip_gen: v7x
topology: tpu7x:2x2x1
jax: 0.10.0
libtpu: 0.0.40
codegen_flags: <defaults>
</compile_context>

<pallas_src>
import functools

import jax
import jax.numpy as jnp
from jax.experimental import pallas as pl
from jax.experimental.pallas import tpu as pltpu


def _triplet_loss_kernel(a_ref, p_ref, n_ref, o_ref, *, margin):
    a = a_ref[...].astype(jnp.float32)
    p = p_ref[...].astype(jnp.float32)
    n = n_ref[...].astype(jnp.float32)

    # dpos - dneg = sum((a-p)^2 - (a-n)^2) = sum((p - n) * (p + n - 2a))
    delta = jnp.sum((p - n) * (p + n - 2.0 * a), axis=-1, keepdims=True)  # (TB, 1)
    o_ref[...] = jnp.maximum(delta + margin, 0.0)  # per-row relu(loss)


def _pick_block_rows(B, D, itemsize, vmem_budget_bytes=24 * 1024 * 1024):
    """Largest row-tile whose double-buffered inputs fit a conservative budget."""
    per_row = 3 * 2 * D * itemsize  # 3 inputs x 2 pipeline buffers
    tb = min(B, max(8, vmem_budget_bytes // max(per_row, 1)))
    if tb < B:
        tb = max(8, (tb // 8) * 8)  # keep (8, 128) alignment on the sublane axis
        tb = min(tb, 1024)          # large enough to hide per-step grid overhead
    else:
        tb = B                      # single full-array block (block == array dim is OK)
    return tb


def triplet_loss(anchor, positive, negative, margin=0.2, block_rows=None):
    B, D = anchor.shape
    itemsize = jnp.dtype(anchor.dtype).itemsize
    tb = block_rows if block_rows is not None else _pick_block_rows(B, D, itemsize)
    grid = (pl.cdiv(B, tb),)

    kernel = functools.partial(_triplet_loss_kernel, margin=float(margin))

    per_row_loss = pl.pallas_call(
        kernel,
        out_shape=jax.ShapeDtypeStruct((B, 1), jnp.float32),
        grid=grid,
        in_specs=[
            pl.BlockSpec((tb, D), lambda i: (i, 0)),
            pl.BlockSpec((tb, D), lambda i: (i, 0)),
            pl.BlockSpec((tb, D), lambda i: (i, 0)),
        ],
        out_specs=pl.BlockSpec((tb, 1), lambda i: (i, 0)),
        compiler_params=pltpu.CompilerParams(
            dimension_semantics=("parallel",),
        ),
        cost_estimate=pl.CostEstimate(
            flops=5 * B * D,
            transcendentals=0,
            bytes_accessed=3 * B * D * itemsize + B * 4,
        ),
    )(anchor, positive, negative)

    # Mean over the true batch size (out-of-bounds rows of a ragged last tile
    # were never written -> output has exactly B valid rows).
    return jnp.mean(per_row_loss[:, 0])


def _reference(anchor, positive, negative, margin):
    a = anchor.astype(jnp.float32)
    p = positive.astype(jnp.float32)
    n = negative.astype(jnp.float32)
    dp = jnp.sum((a - p) ** 2, axis=1)
    dn = jnp.sum((a - n) ** 2, axis=1)
    return jnp.mean(jnp.maximum(dp - dn + margin, 0.0))


if __name__ == "__main__":
    key = jax.random.PRNGKey(0)

    # --- Test 1: small f32, single block --------------------------------
    B, D = 8, 128
    k_a, k_p, k_n, key = jax.random.split(key, 4)
    anchor = jax.random.normal(k_a, (B, D), dtype=jnp.float32)
    positive = jax.random.normal(k_p, (B, D), dtype=jnp.float32)
    negative = jax.random.normal(k_n, (B, D), dtype=jnp.float32)

    loss = triplet_loss(anchor, positive, negative, margin=0.2)
    jax.block_until_ready(loss)
    ref = _reference(anchor, positive, negative, 0.2)
    assert jnp.allclose(loss, ref, rtol=1e-4, atol=1e-4), (loss, ref)

    # --- Test 2: ragged batch tiling (B not a multiple of block_rows) ----
    B2, D2 = 20, 128
    k_a, k_p, k_n, key = jax.random.split(key, 4)
    a2 = jax.random.normal(k_a, (B2, D2), dtype=jnp.float32)
    p2 = jax.random.normal(k_p, (B2, D2), dtype=jnp.float32)
    n2 = jax.random.normal(k_n, (B2, D2), dtype=jnp.float32)

    loss2 = triplet_loss(a2, p2, n2, margin=0.2, block_rows=8)  # grid=(3,), ragged last tile
    jax.block_until_ready(loss2)
    ref2 = _reference(a2, p2, n2, 0.2)
    assert jnp.allclose(loss2, ref2, rtol=1e-4, atol=1e-4), (loss2, ref2)

    # --- Test 3: bf16 inputs (halved HBM traffic; f32 math in-kernel) ----
    B3, D3 = 16, 256
    k_a, k_p, k_n, key = jax.random.split(key, 4)
    a3 = jax.random.normal(k_a, (B3, D3), dtype=jnp.float32).astype(jnp.bfloat16)
    p3 = jax.random.normal(k_p, (B3, D3), dtype=jnp.float32).astype(jnp.bfloat16)
    n3 = jax.random.normal(k_n, (B3, D3), dtype=jnp.float32).astype(jnp.bfloat16)

    loss3 = triplet_loss(a3, p3, n3, margin=0.2)
    jax.block_until_ready(loss3)
    ref3 = _reference(a3, p3, n3, 0.2)
    assert jnp.allclose(loss3, ref3, rtol=1e-3, atol=1e-3), (loss3, ref3)

    print("KERNEL_OK")
</pallas_src>

<mosaic_0001>
module attributes {stable_mosaic.version = 11 : i64} {
  func.func @_triplet_loss_kernel(%arg0: i32, %arg1: memref<8x128xf32, #tpu.memory_space<vmem>>, %arg2: memref<8x128xf32, #tpu.memory_space<vmem>>, %arg3: memref<8x128xf32, #tpu.memory_space<vmem>>, %arg4: memref<8x1xf32, #tpu.memory_space<vmem>>) attributes {dimension_semantics = [#tpu.dimension_semantics<parallel>], iteration_bounds = array<i64: 1>, scalar_prefetch = 0 : i64, scratch_operands = 0 : i64, tpu.core_type = #tpu.core_type<tc>, window_params = [{transform_indices = @transform_0, window_bounds = array<i64: 8, 128>}, {transform_indices = @transform_1, window_bounds = array<i64: 8, 128>}, {transform_indices = @transform_2, window_bounds = array<i64: 8, 128>}, {transform_indices = @transform_3, window_bounds = array<i64: 8, 1>}]} {
    %c0 = arith.constant 0 : index
    %c0_0 = arith.constant 0 : index
    %0 = vector.load %arg1[%c0, %c0_0] : memref<8x128xf32, #tpu.memory_space<vmem>>, vector<8x128xf32>
    %c0_1 = arith.constant 0 : index
    %c0_2 = arith.constant 0 : index
    %1 = vector.load %arg2[%c0_1, %c0_2] : memref<8x128xf32, #tpu.memory_space<vmem>>, vector<8x128xf32>
    %c0_3 = arith.constant 0 : index
    %c0_4 = arith.constant 0 : index
    %2 = vector.load %arg3[%c0_3, %c0_4] : memref<8x128xf32, #tpu.memory_space<vmem>>, vector<8x128xf32>
    %3 = arith.subf %1, %2 : vector<8x128xf32>
    %4 = arith.addf %1, %2 : vector<8x128xf32>
    %cst = arith.constant 2.000000e+00 : f32
    %5 = vector.broadcast %cst : f32 to vector<8x128xf32>
    %6 = arith.mulf %5, %0 : vector<8x128xf32>
    %7 = arith.subf %4, %6 : vector<8x128xf32>
    %8 = arith.mulf %3, %7 : vector<8x128xf32>
    %cst_5 = arith.constant dense<0.000000e+00> : vector<8xf32>
    %9 = vector.multi_reduction <add>, %8, %cst_5 [1] : vector<8x128xf32> to vector<8xf32>
    %10 = vector.shape_cast %9 : vector<8xf32> to vector<8x1xf32>
    %cst_6 = arith.constant 2.000000e-01 : f32
    %11 = vector.broadcast %cst_6 : f32 to vector<8x1xf32>
    %12 = arith.addf %10, %11 : vector<8x1xf32>
    %cst_7 = arith.constant 0.000000e+00 : f32
    %13 = vector.broadcast %cst_7 : f32 to vector<8x1xf32>
    %14 = arith.maximumf %12, %13 : vector<8x1xf32>
    %c0_8 = arith.constant 0 : index
    %c0_9 = arith.constant 0 : index
    %15 = vector.load %arg4[%c0_8, %c0_9] : memref<8x1xf32, #tpu.memory_space<vmem>>, vector<8x1xf32>
    tpu.vector_store %arg4[%c0_8, %c0_9], %14 {strides = array<i32>} : memref<8x1xf32, #tpu.memory_space<vmem>>, vector<8x1xf32>,
    return
  }
  func.func @transform_0(%arg0: i32) -> (i32, i32) {
    %c0_i32 = arith.constant 0 : i32
    %c0_i32_0 = arith.constant 0 : i32
    return %arg0, %c0_i32 : i32, i32
  }
  func.func @transform_1(%arg0: i32) -> (i32, i32) {
    %c0_i32 = arith.constant 0 : i32
    %c0_i32_0 = arith.constant 0 : i32
    return %arg0, %c0_i32 : i32, i32
  }
  func.func @transform_2(%arg0: i32) -> (i32, i32) {
    %c0_i32 = arith.constant 0 : i32
    %c0_i32_0 = arith.constant 0 : i32
    return %arg0, %c0_i32 : i32, i32
  }
  func.func @transform_3(%arg0: i32) -> (i32, i32) {
    %c0_i32 = arith.constant 0 : i32
    %c0_i32_0 = arith.constant 0 : i32
    return %arg0, %c0_i32 : i32, i32
  }
}

</mosaic_0001>

<llo_original>
// kernel: tpu_custom_call.1
$region0: #{tpu_custom_call.1}
  #allocation0 [shape = 'u32[]', space=smem, size = 0x4, offset = 0x4, fixed_abs, tag = 'smem constant byte address 0x4 - core index']
  #allocation1 [shape = 'u32[144,128]{1,0:T(1,128)}', space=vmem, size = 0x12000, scoped, tag = 'internal scratch']
  %s0 = inlined_call_operand.hbm [shape: f32[8,128], index: 0, kind: input, shape index: {}]
  %s1 = inlined_call_operand.hbm [shape: f32[8,128], index: 1, kind: input, shape index: {}]
  %s2 = inlined_call_operand.hbm [shape: f32[8,128], index: 2, kind: input, shape index: {}]
  %s3 = inlined_call_operand.vmem [shape: f32[8,1], index: 3, kind: output, shape index: {}]
  %s4 = sld [smem:[#allocation0]]
  $region34: #{tpu_custom_call.1} parent=0
    _
  %s6 = ssub.s32 1, %s4
  %s7 = scalar_select 0, %s6, %s4
  $region1: #{tpu_custom_call.1} parent=0
    #allocation2 [shape = 'u8[4096]{0}', space=vmem, size = 0x1000, scoped, tag = 'input window, operand 0, single buffered']
    #allocation3 [shape = 's32[1]{0}', space=sflag, size = 0x4, scoped, tag = 'scoped memory for tpu_custom_call.1']
    #allocation4 [shape = 'u8[4096]{0}', space=vmem, size = 0x1000, scoped, tag = 'input window, operand 1, single buffered']
    #allocation5 [shape = 's32[1]{0}', space=sflag, size = 0x4, scoped, tag = 'scoped memory for tpu_custom_call.1']
    #allocation6 [shape = 'u8[4096]{0}', space=vmem, size = 0x1000, scoped, tag = 'input window, operand 2, single buffered']
    %8 = vsyncpa [#allocation3], 0
    %9 = vsyncpa [#allocation5], 0
    // Predicated region
    $region2: #{tpu_custom_call.1} parent=1 // pred_check
      _
    $region3: #{tpu_custom_call.1} parent=1 // pred_check_branch
      %11 = sbr.rel (0) target = $region5
    $region4: #{tpu_custom_call.1} parent=1 // pred_region
      %s13 = ssub.s32 128, 128
      %14 = vsyncadd [#allocation3], %s13
      %s16 = sshll.u32 [#allocation2], 4
      %s17 = int_to_ptr.vmem [resolvable:$true] %s16
      %19 = dma.hbm_to_vmem [thread:$0]  %s0, 128, %s17, [#allocation3]
    $region5: #{tpu_custom_call.1} parent=1 // pred_fallthru
      _
    // Predicated region
    $region6: #{tpu_custom_call.1} parent=1 // pred_check
      _
    $region7: #{tpu_custom_call.1} parent=1 // pred_check_branch
      %21 = sbr.rel (0) target = $region9
    $region8: #{tpu_custom_call.1} parent=1 // pred_region
      %s23 = ssub.s32 128, 128
      %24 = vsyncadd [#allocation5], %s23
      %s26 = sshll.u32 [#allocation4], 4
      %s27 = int_to_ptr.vmem [resolvable:$true] %s26
      %29 = dma.hbm_to_vmem [thread:$0]  %s1, 128, %s27, [#allocation5]
    $region9: #{tpu_custom_call.1} parent=1 // pred_fallthru
      _
    // Predicated region
    $region10: #{tpu_custom_call.1} parent=1 // pred_check
      _
    $region11: #{tpu_custom_call.1} parent=1 // pred_check_branch
      %31 = sbr.rel (0) target = $region13
    $region12: #{tpu_custom_call.1} parent=1 // pred_region
      %s33 = ssub.s32 128, 128
      %34 = vsyncadd [#allocation5], %s33
      %s36 = sshll.u32 [#allocation6], 4
      %s37 = int_to_ptr.vmem [resolvable:$true] %s36
      %39 = dma.hbm_to_vmem [thread:$0]  %s2, 128, %s37, [#allocation5]
    $region13: #{tpu_custom_call.1} parent=1 // pred_fallthru
      _
    // Predicated region
    $region14: #{tpu_custom_call.1} parent=1 // pred_check
      _
    $region15: #{tpu_custom_call.1} parent=1 // pred_check_branch
      %41 = sbr.rel (0) target = $region17
    $region16: #{tpu_custom_call.1} parent=1 // pred_region
      %42 = dma.done [#allocation3], 128
    $region17: #{tpu_custom_call.1} parent=1 // pred_fallthru
      _
    // Predicated region
    $region18: #{tpu_custom_call.1} parent=1 // pred_check
      _
    $region19: #{tpu_custom_call.1} parent=1 // pred_check_branch
      %44 = sbr.rel (0) target = $region21
    $region20: #{tpu_custom_call.1} parent=1 // pred_region
      %45 = dma.done [#allocation5], 128
    $region21: #{tpu_custom_call.1} parent=1 // pred_fallthru
      _
    // Predicated region
    $region22: #{tpu_custom_call.1} parent=1 // pred_check
      _
    $region23: #{tpu_custom_call.1} parent=1 // pred_check_branch
      %47 = sbr.rel (0) target = $region25
    $region24: #{tpu_custom_call.1} parent=1 // pred_region
      %48 = dma.done [#allocation5], 128
    $region25: #{tpu_custom_call.1} parent=1 // pred_fallthru
      _
    %v49 = vld [vmem:[#allocation2] sm:$0xff]
    %v50 = vld [vmem:[#allocation4] sm:$0xff]
    %v51 = vld [vmem:[#allocation6] sm:$0xff]
    %v52 = vsub.f32 %v50, %v51
    %v53 = vadd.f32 %v50, %v51
    %v54 = vmul.f32 %v49, 2.0
    %v55 = vsub.f32 %v53, %v54
    %v56 = vmul.f32 %v52, %v55
    %57 = vadd.xlane.f32.xlu0 %v56
    %v58 = vpop.xlane.xlu0 %57
    %v59 = vadd.f32 %v58, 0.2
    %v60 = vmax.f32 %v59, 0.0
    %vm61 = vcmask 7168
    %62 = vst.msk [vmem:[%s3] sm:$0xff] %vm61, %v60
    // Predicated region
    $region26: #{tpu_custom_call.1} parent=1 // pred_check
      _
    $region27: #{tpu_custom_call.1} parent=1 // pred_check_branch
      %64 = sbr.rel (0) target = $region29
    $region28: #{tpu_custom_call.1} parent=1 // pred_region
      _
    $region29: #{tpu_custom_call.1} parent=1 // pred_fallthru
      _
    // Predicated region
    $region30: #{tpu_custom_call.1} parent=1 // pred_check
      _
    $region31: #{tpu_custom_call.1} parent=1 // pred_check_branch
      %66 = sbr.rel (0) target = $region33
    $region32: #{tpu_custom_call.1} parent=1 // pred_region
      _
    $region33: #{tpu_custom_call.1} parent=1 // pred_fallthru
      _
    %67 = vsyncpa [#allocation3], 1
    %68 = vsyncpa [#allocation5], 1

</llo_original>
